<compile_context>
chip_gen: v7x
topology: tpu7x:2x2x1
jax: 0.10.0
libtpu: 0.0.40
codegen_flags: <defaults>
</compile_context>

<pallas_src>
import functools
import math

import jax
import jax.numpy as jnp
from jax import lax
from jax.experimental import pallas as pl
from jax.experimental.pallas import tpu as pltpu


OFFSET = 0.168


def _round_up(x, m):
    return ((x + m - 1) // m) * m


def _cdiv(a, b):
    return -(-a // b)


# --------------------------------------------------------------------------- kernels

def _ln_kernel_single(s_ref, rf_ref, noise_ref, out_ref):
    """Whole-K in one grid step: dot + noise + offset + threshold, no scratch."""
    # (B, K) contracted with (tp, K) over K -> (B, tp), expressed directly as a
    # dot_general so Mosaic feeds the MXU with the transposed-RHS form natively
    # (no XLU transpose / VMEM relayout).
    v = lax.dot_general(
        s_ref[...],
        rf_ref[...],
        dimension_numbers=(((1,), (1,)), ((), ())),
        preferred_element_type=jnp.float32,
    )
    v = v + noise_ref[...] + OFFSET        # noise broadcast over batch
    # clip(x, 0, 1) > 0.5  ==  x > 0.5  -> clip dropped.
    out_ref[...] = (v > 0.5).astype(jnp.int8)


def _ln_kernel_multi(s_ref, rf_ref, noise_ref, out_ref, acc_ref):
    """Grid: (P tiles [parallel], K tiles [arbitrary reduction])."""
    k = pl.program_id(1)

    @pl.when(k == 0)
    def _():
        acc_ref[...] = jnp.zeros_like(acc_ref)

    acc_ref[...] += lax.dot_general(
        s_ref[...],
        rf_ref[...],
        dimension_numbers=(((1,), (1,)), ((), ())),
        preferred_element_type=jnp.float32,
    )

    @pl.when(k == pl.num_programs(1) - 1)
    def _():
        v = acc_ref[...] + noise_ref[...] + OFFSET
        out_ref[...] = (v > 0.5).astype(jnp.int8)


# ---------------------------------------------------------------- planning / geometry

def _vmem_defaults():
    """(vmem_budget_bytes, vmem_limit_bytes) tuned per TPU generation."""
    cap = None
    try:
        info = pltpu.get_tpu_info()
        for name in ("vmem_capacity_bytes", "vmem_size_bytes", "vmem_bytes"):
            v = getattr(info, name, None)
            if v:
                cap = int(v)
                break
    except Exception:
        cap = None
    if cap is None:
        # Unknown chip: conservative values that compile everywhere.
        return 14 << 20, 24 << 20
    if cap <= (64 << 20):
        # v7x: 64 MiB physical per TensorCore -> leave headroom.
        return 20 << 20, 28 << 20
    # v5e / v6e: 128 MiB physical; raise the 16/32 MiB default scoped limit.
    return 28 << 20, 40 << 20


def _plan_geometry(P, K, b_alloc, compute_dtype, vmem_budget_bytes):
    P_pad = _round_up(P, 128)                 # lane-dense output, full MXU N width
    # >=2 p-tiles whenever possible so the 'parallel' axis feeds both v7x cores.
    if P_pad % 256 == 0 and P_pad // 256 >= 2:
        tile_p = 256
    else:
        tile_p = 128
    # TODO(synk): for P_pad == 128 on v7x, a K-split across cores with a partial-sum
    # combine would be needed to use the second TensorCore.

    itemsize = jnp.dtype(compute_dtype).itemsize
    K_128 = _round_up(K, 128)

    # Bytes that scale with tile_k: double-buffered s and rf input tiles.
    per_k_bytes = 2 * (b_alloc + tile_p) * itemsize
    # Fixed bytes: f32 accumulator + double-buffered int8 output + noise.
    fixed_bytes = (b_alloc * tile_p) * 4 + 2 * (b_alloc * tile_p) * 1 + 2 * tile_p * 4
    avail = max(vmem_budget_bytes - fixed_bytes, 512 * per_k_bytes)
    # Floor 512: keeps each rf DMA row >= ~1 KiB (bf16) so the stream stays near
    # the HBM roofline.
    max_tile_k = max(512, (avail // per_k_bytes) // 128 * 128)

    if K_128 <= max_tile_k:
        tile_k = K_128                        # whole K in a single grid step
    else:
        # Balanced tile_k: same number of K steps as max_tile_k, minimal zero-pad.
        n_steps = _cdiv(K_128, max_tile_k)
        tile_k = _round_up(_cdiv(K_128, n_steps), 128)
    K_pad = _round_up(K, tile_k)
    return dict(P_pad=P_pad, tile_p=tile_p, tile_k=tile_k, K_pad=K_pad)


# --------------------------------------------------------------------------- forward

def _ln_forward(s, rf_flat, noise_sample, *, P, K, P_pad, K_pad, tile_p, tile_k,
                compute_dtype, vmem_limit_bytes):
    """s: (B, 1, T, H, W); rf_flat: pre-padded (P_pad, K_pad) compute_dtype;
    noise_sample: (P,) f32.  Returns bool (B, P)."""
    B = s.shape[0]
    B_pad = max(8, _round_up(B, 8))           # fill sublanes / MXU rows

    # Stimulus is tiny: pad / cast per call (zeros don't change the dot product).
    s_flat = jnp.pad(s.reshape(B, K).astype(compute_dtype),
                     ((0, B_pad - B), (0, K_pad - K)))
    noise2d = jnp.pad(noise_sample.astype(jnp.float32).reshape(1, P),
                      ((0, 0), (0, P_pad - P)))

    n_p = P_pad // tile_p
    n_k = K_pad // tile_k

    if n_k == 1:
        # Single-step fast path: 1-D grid, no accumulator scratch.
        out_i8 = pl.pallas_call(
            _ln_kernel_single,
            out_shape=jax.ShapeDtypeStruct((B_pad, P_pad), jnp.int8),
            grid_spec=pltpu.PrefetchScalarGridSpec(
                num_scalar_prefetch=0,
                grid=(n_p,),
                in_specs=[
                    pl.BlockSpec((B_pad, tile_k), lambda p: (0, 0)),   # stimulus
                    pl.BlockSpec((tile_p, tile_k), lambda p: (p, 0)),  # receptive fields
                    pl.BlockSpec((1, tile_p), lambda p: (0, p)),       # noise
                ],
                out_specs=pl.BlockSpec((B_pad, tile_p), lambda p: (0, p)),
            ),
            compiler_params=pltpu.CompilerParams(
                dimension_semantics=("parallel",),
                vmem_limit_bytes=vmem_limit_bytes,
            ),
        )(s_flat, rf_flat, noise2d)
    else:
        out_i8 = pl.pallas_call(
            _ln_kernel_multi,
            out_shape=jax.ShapeDtypeStruct((B_pad, P_pad), jnp.int8),
            grid_spec=pltpu.PrefetchScalarGridSpec(
                num_scalar_prefetch=0,
                grid=(n_p, n_k),
                in_specs=[
                    pl.BlockSpec((B_pad, tile_k), lambda p, k: (0, k)),
                    pl.BlockSpec((tile_p, tile_k), lambda p, k: (p, k)),
                    pl.BlockSpec((1, tile_p), lambda p, k: (0, p)),
                ],
                out_specs=pl.BlockSpec((B_pad, tile_p), lambda p, k: (0, p)),
                scratch_shapes=[pltpu.VMEM((B_pad, tile_p), jnp.float32)],
            ),
            compiler_params=pltpu.CompilerParams(
                dimension_semantics=("parallel", "arbitrary"),
                vmem_limit_bytes=vmem_limit_bytes,
            ),
        )(s_flat, rf_flat, noise2d)

    return out_i8[:B, :P].astype(jnp.bool_)


class LNSignaturePaper:
    """JAX/Pallas port of LN_signature_paper's forward pass.

    Receptive fields (the weights) are flattened / padded / cast once at
    construction, so per-call HBM traffic is only the prepared rf slab, the tiny
    stimulus, and the (int8) output.
    """

    def __init__(self, receptive_fields, *, compute_dtype=jnp.bfloat16,
                 max_batch=64, vmem_budget_bytes=None, vmem_limit_bytes=None):
        receptive_fields = jnp.asarray(receptive_fields)
        P = receptive_fields.shape[0]
        K = math.prod(receptive_fields.shape[1:])

        budget_default, limit_default = _vmem_defaults()
        budget = vmem_budget_bytes if vmem_budget_bytes is not None else budget_default
        limit = vmem_limit_bytes if vmem_limit_bytes is not None else limit_default

        self.P = P
        self.K = K
        self.max_batch = max_batch
        b_alloc = max(8, _round_up(max_batch, 8))
        geom = _plan_geometry(P, K, b_alloc, compute_dtype, budget)

        # Pre-pad / flatten / cast rf ONCE (cached weight slab).
        self._rf_flat = jnp.pad(
            receptive_fields.reshape(P, K).astype(compute_dtype),
            ((0, geom["P_pad"] - P), (0, geom["K_pad"] - K)))

        self._forward = jax.jit(functools.partial(
            _ln_forward, P=P, K=K, compute_dtype=compute_dtype,
            vmem_limit_bytes=limit, **geom))

    def __call__(self, s, noise_sample):
        if s.shape[0] > self.max_batch:
            raise ValueError(
                f"batch {s.shape[0]} exceeds max_batch={self.max_batch}; "
                "construct LNSignaturePaper with a larger max_batch.")
        if math.prod(s.shape[1:]) != self.K:
            raise ValueError("stimulus must match the receptive-field extent "
                             "(conv3d output = 1x1x1).")
        return self._forward(s, self._rf_flat, noise_sample)


# ----------------------------------------------------------------- noise (plain JAX)

def make_noise_covariance(population_size, cov=0.9):
    """cov given as float -> matrix with 1 on diagonal, `cov` off-diagonal
    (mirrors _noiseDistribution with self.cov = 0.9)."""
    c = jnp.full((population_size, population_size), cov, dtype=jnp.float32)
    c = c.at[jnp.arange(population_size), jnp.arange(population_size)].set(1.0)
    return c


def sample_mvn(key, cov):
    """Deterministic MultivariateNormal(0, cov) sample via Cholesky."""
    p = cov.shape[0]
    L = jnp.linalg.cholesky(cov)
    z = jax.random.normal(key, (p,), dtype=jnp.float32)
    return L @ z


if __name__ == "__main__":
    # Small shapes consistent with the module's forward:
    #   s: (batch, 1, timesteps, H, W); receptive_fields: (population, 1, timesteps, H, W)
    batch = 2
    population_size = 4
    timesteps = 8
    H = W = 16

    key = jax.random.PRNGKey(0)
    k_s, k_rf, k_noise = jax.random.split(key, 3)

    s = jax.random.normal(k_s, (batch, 1, timesteps, H, W), dtype=jnp.float32)
    # Deterministic parameter init (scaled so conv outputs land near the [0,1] window).
    receptive_fields = (
        jax.random.normal(k_rf, (population_size, 1, timesteps, H, W), dtype=jnp.float32)
        * 0.01
    )

    # Noise distribution: cov = 0.9 -> 1 on diag, 0.9 off-diag; one sample per forward.
    cov = make_noise_covariance(population_size, 0.9)
    noise_sample = sample_mvn(k_noise, cov)

    model = LNSignaturePaper(receptive_fields)        # rf prepared (bf16) once here
    spikes = model(s, noise_sample)
    spikes = jax.block_until_ready(spikes)

    # Pure-JAX reference of the same forward math on the same bf16-cast operands
    # (f32 accumulation) — kernel differs from a pure-f32 path only for interim
    # values within bf16 rounding error of the 0.5 threshold.
    K = 1 * timesteps * H * W
    s_c = s.reshape(batch, K).astype(jnp.bfloat16)
    rf_c = receptive_fields.reshape(population_size, K).astype(jnp.bfloat16)
    interim_ref = jnp.dot(s_c, rf_c.T, preferred_element_type=jnp.float32)
    interim_ref = jnp.clip(interim_ref + noise_sample[None, :] + OFFSET, 0.0, 1.0)
    spikes_ref = interim_ref > 0.5

    assert spikes.shape == (batch, population_size)
    assert spikes.dtype == jnp.bool_
    assert bool(jnp.all(spikes == spikes_ref))

    print("KERNEL_OK")
</pallas_src>

<mosaic_0001>
module attributes {stable_mosaic.version = 11 : i64} {
  func.func @_ln_kernel_single(%arg0: i32, %arg1: memref<8x2048xbf16, #tpu.memory_space<vmem>>, %arg2: memref<128x2048xbf16, #tpu.memory_space<vmem>>, %arg3: memref<1x128xf32, #tpu.memory_space<vmem>>, %arg4: memref<8x128xi8, #tpu.memory_space<vmem>>) attributes {dimension_semantics = [#tpu.dimension_semantics<parallel>], iteration_bounds = array<i64: 1>, scalar_prefetch = 0 : i64, scratch_operands = 0 : i64, tpu.core_type = #tpu.core_type<tc>, window_params = [{pipeline_mode = #tpu.pipeline_mode<synchronous>, transform_indices = @transform_0, window_bounds = array<i64: 8, 2048>}, {transform_indices = @transform_1, window_bounds = array<i64: 128, 2048>}, {transform_indices = @transform_2, window_bounds = array<i64: 1, 128>}, {transform_indices = @transform_3, window_bounds = array<i64: 8, 128>}]} {
    %c0 = arith.constant 0 : index
    %c0_0 = arith.constant 0 : index
    %0 = vector.load %arg1[%c0, %c0_0] : memref<8x2048xbf16, #tpu.memory_space<vmem>>, vector<8x2048xbf16>
    %c0_1 = arith.constant 0 : index
    %c0_2 = arith.constant 0 : index
    %1 = vector.load %arg2[%c0_1, %c0_2] : memref<128x2048xbf16, #tpu.memory_space<vmem>>, vector<128x2048xbf16>
    %cst = arith.constant dense<0.000000e+00> : vector<8x128xf32>
    %2 = tpu.matmul %0, %1, %cst {dimension_numbers = #tpu.dot_dimension_numbers<[1], [1], [0], [0], [0, 0, 1, 0], [], []>} : vector<8x2048xbf16>, vector<128x2048xbf16>, vector<8x128xf32> -> vector<8x128xf32>
    %c0_3 = arith.constant 0 : index
    %c0_4 = arith.constant 0 : index
    %3 = vector.load %arg3[%c0_3, %c0_4] : memref<1x128xf32, #tpu.memory_space<vmem>>, vector<1x128xf32>
    %4 = vector.broadcast %3 : vector<1x128xf32> to vector<8x128xf32>
    %5 = arith.addf %2, %4 : vector<8x128xf32>
    %cst_5 = arith.constant 1.680000e-01 : f32
    %6 = vector.broadcast %cst_5 : f32 to vector<8x128xf32>
    %7 = arith.addf %5, %6 : vector<8x128xf32>
    %cst_6 = arith.constant 5.000000e-01 : f32
    %8 = vector.broadcast %cst_6 : f32 to vector<8x128xf32>
    %9 = arith.cmpf ogt, %7, %8 : vector<8x128xf32>
    %10 = arith.extui %9 : vector<8x128xi1> to vector<8x128xi8>
    %c0_7 = arith.constant 0 : index
    %c0_8 = arith.constant 0 : index
    %11 = vector.load %arg4[%c0_7, %c0_8] : memref<8x128xi8, #tpu.memory_space<vmem>>, vector<8x128xi8>
    tpu.vector_store %arg4[%c0_7, %c0_8], %10 {strides = array<i32>} : memref<8x128xi8, #tpu.memory_space<vmem>>, vector<8x128xi8>,
    return
  }
  func.func @transform_0(%arg0: i32) -> (i32, i32) {
    %c0_i32 = arith.constant 0 : i32
    %c0_i32_0 = arith.constant 0 : i32
    %c0_i32_1 = arith.constant 0 : i32
    return %c0_i32, %c0_i32_0 : i32, i32
  }
  func.func @transform_1(%arg0: i32) -> (i32, i32) {
    %c0_i32 = arith.constant 0 : i32
    %c0_i32_0 = arith.constant 0 : i32
    return %arg0, %c0_i32 : i32, i32
  }
  func.func @transform_2(%arg0: i32) -> (i32, i32) {
    %c0_i32 = arith.constant 0 : i32
    %c0_i32_0 = arith.constant 0 : i32
    return %c0_i32, %arg0 : i32, i32
  }
  func.func @transform_3(%arg0: i32) -> (i32, i32) {
    %c0_i32 = arith.constant 0 : i32
    %c0_i32_0 = arith.constant 0 : i32
    return %c0_i32, %arg0 : i32, i32
  }
}

</mosaic_0001>

<llo_original>
// kernel: _ln_forward.1
$region0: #{_ln_forward.1}
  #allocation0 [shape = 'u32[]', space=smem, size = 0x4, offset = 0x4, fixed_abs, tag = 'smem constant byte address 0x4 - core index']
  #allocation1 [shape = 'u32[144,128]{1,0:T(1,128)}', space=vmem, size = 0x12000, scoped, tag = 'internal scratch']
  %s0 = inlined_call_operand.vmem [shape: bf16[8,2048], index: 0, kind: input, shape index: {}]
  %s1 = inlined_call_operand.hbm [shape: bf16[128,2048], index: 1, kind: input, shape index: {}]
  %s2 = inlined_call_operand.vmem [shape: f32[1,128], index: 2, kind: input, shape index: {}]
  %s3 = inlined_call_operand.vmem [shape: s8[8,128], index: 3, kind: output, shape index: {}]
  %s4 = sld [smem:[#allocation0]]
  $region26: #{_ln_forward.1} parent=0
    _
  %s6 = ssub.s32 1, %s4
  %s7 = scalar_select 0, %s6, %s4
  $region1: #{_ln_forward.1} parent=0
    #allocation2 [shape = 'u8[524288]{0}', space=vmem, size = 0x80000, scoped, tag = 'input window, operand 1, single buffered']
    #allocation3 [shape = 's32[1]{0}', space=sflag, size = 0x4, scoped, tag = 'scoped memory for _ln_forward.1']
    %8 = vsyncpa [#allocation3], 0
    // Predicated region
    $region2: #{_ln_forward.1} parent=1 // pred_check
      _
    $region3: #{_ln_forward.1} parent=1 // pred_check_branch
      %10 = sbr.rel (0) target = $region5
    $region4: #{_ln_forward.1} parent=1 // pred_region
      _
    $region5: #{_ln_forward.1} parent=1 // pred_fallthru
      _
    // Predicated region
    $region6: #{_ln_forward.1} parent=1 // pred_check
      _
    $region7: #{_ln_forward.1} parent=1 // pred_check_branch
      %12 = sbr.rel (0) target = $region9
    $region8: #{_ln_forward.1} parent=1 // pred_region
      %s14 = ssub.s32 16384, 16384
      %15 = vsyncadd [#allocation3], %s14
      %s16 = sshll.u32 [#allocation2], 4
      %s17 = int_to_ptr.vmem [resolvable:$true] %s16
      %22 = dma.hbm_to_vmem [thread:$0]  %s1, 16384, %s17, [#allocation3], 1024, 1024, 64
    $region9: #{_ln_forward.1} parent=1 // pred_fallthru
      _
    // Predicated region
    $region10: #{_ln_forward.1} parent=1 // pred_check
      _
    $region11: #{_ln_forward.1} parent=1 // pred_check_branch
      %24 = sbr.rel (0) target = $region13
    $region12: #{_ln_forward.1} parent=1 // pred_region
      _
    $region13: #{_ln_forward.1} parent=1 // pred_fallthru
      _
    // Predicated region
    $region14: #{_ln_forward.1} parent=1 // pred_check
      _
    $region15: #{_ln_forward.1} parent=1 // pred_check_branch
      %26 = sbr.rel (0) target = $region17
    $region16: #{_ln_forward.1} parent=1 // pred_region
      %27 = dma.done [#allocation3], 16384
    $region17: #{_ln_forward.1} parent=1 // pred_fallthru
      _
    %v31 = vld [vmem:[%s0] sm:$0xff]
    %v32 = vld [vmem:[%s0 + $0x8] sm:$0xff]
    %v33 = vld [vmem:[%s0 + $0x10] sm:$0xff]
    %v34 = vld [vmem:[%s0 + $0x18] sm:$0xff]
    %v35 = vld [vmem:[%s0 + $0x20] sm:$0xff]
    %v36 = vld [vmem:[%s0 + $0x28] sm:$0xff]
    %v37 = vld [vmem:[%s0 + $0x30] sm:$0xff]
    %v38 = vld [vmem:[%s0 + $0x38] sm:$0xff]
    %v39 = vld [vmem:[#allocation2] sm:$0xff]
    %v40 = vld [vmem:[#allocation2 + $0x8] sm:$0xff]
    %v41 = vld [vmem:[#allocation2 + $0x10] sm:$0xff]
    %v42 = vld [vmem:[#allocation2 + $0x18] sm:$0xff]
    %v43 = vld [vmem:[#allocation2 + $0x20] sm:$0xff]
    %v44 = vld [vmem:[#allocation2 + $0x28] sm:$0xff]
    %v45 = vld [vmem:[#allocation2 + $0x30] sm:$0xff]
    %v46 = vld [vmem:[#allocation2 + $0x38] sm:$0xff]
    %v47 = vld [vmem:[#allocation2 + $0x40] sm:$0xff]
    %v48 = vld [vmem:[#allocation2 + $0x48] sm:$0xff]
    %v49 = vld [vmem:[#allocation2 + $0x50] sm:$0xff]
    %v50 = vld [vmem:[#allocation2 + $0x58] sm:$0xff]
    %v51 = vld [vmem:[#allocation2 + $0x60] sm:$0xff]
    %v52 = vld [vmem:[#allocation2 + $0x68] sm:$0xff]
    %v53 = vld [vmem:[#allocation2 + $0x70] sm:$0xff]
    %v54 = vld [vmem:[#allocation2 + $0x78] sm:$0xff]
    %v55 = vld [vmem:[#allocation2 + $0x80] sm:$0xff]
    %v56 = vld [vmem:[#allocation2 + $0x88] sm:$0xff]
    %v57 = vld [vmem:[#allocation2 + $0x90] sm:$0xff]
    %v58 = vld [vmem:[#allocation2 + $0x98] sm:$0xff]
    %v59 = vld [vmem:[#allocation2 + $0xa0] sm:$0xff]
    %v60 = vld [vmem:[#allocation2 + $0xa8] sm:$0xff]
    %v61 = vld [vmem:[#allocation2 + $0xb0] sm:$0xff]
    %v62 = vld [vmem:[#allocation2 + $0xb8] sm:$0xff]
    %v63 = vld [vmem:[#allocation2 + $0xc0] sm:$0xff]
    %v64 = vld [vmem:[#allocation2 + $0xc8] sm:$0xff]
    %v65 = vld [vmem:[#allocation2 + $0xd0] sm:$0xff]
    %v66 = vld [vmem:[#allocation2 + $0xd8] sm:$0xff]
    %v67 = vld [vmem:[#allocation2 + $0xe0] sm:$0xff]
    %v68 = vld [vmem:[#allocation2 + $0xe8] sm:$0xff]
    %v69 = vld [vmem:[#allocation2 + $0xf0] sm:$0xff]
    %v70 = vld [vmem:[#allocation2 + $0xf8] sm:$0xff]
    %v71 = vld [vmem:[#allocation2 + $0x100] sm:$0xff]
    %v72 = vld [vmem:[#allocation2 + $0x108] sm:$0xff]
    %v73 = vld [vmem:[#allocation2 + $0x110] sm:$0xff]
    %v74 = vld [vmem:[#allocation2 + $0x118] sm:$0xff]
    %v75 = vld [vmem:[#allocation2 + $0x120] sm:$0xff]
    %v76 = vld [vmem:[#allocation2 + $0x128] sm:$0xff]
    %v77 = vld [vmem:[#allocation2 + $0x130] sm:$0xff]
    %v78 = vld [vmem:[#allocation2 + $0x138] sm:$0xff]
    %v79 = vld [vmem:[#allocation2 + $0x140] sm:$0xff]
    %v80 = vld [vmem:[#allocation2 + $0x148] sm:$0xff]
    %v81 = vld [vmem:[#allocation2 + $0x150] sm:$0xff]
    %v82 = vld [vmem:[#allocation2 + $0x158] sm:$0xff]
    %v83 = vld [vmem:[#allocation2 + $0x160] sm:$0xff]
    %v84 = vld [vmem:[#allocation2 + $0x168] sm:$0xff]
    %v85 = vld [vmem:[#allocation2 + $0x170] sm:$0xff]
    %v86 = vld [vmem:[#allocation2 + $0x178] sm:$0xff]
    %v87 = vld [vmem:[#allocation2 + $0x180] sm:$0xff]
    %v88 = vld [vmem:[#allocation2 + $0x188] sm:$0xff]
    %v89 = vld [vmem:[#allocation2 + $0x190] sm:$0xff]
    %v90 = vld [vmem:[#allocation2 + $0x198] sm:$0xff]
    %v91 = vld [vmem:[#allocation2 + $0x1a0] sm:$0xff]
    %v92 = vld [vmem:[#allocation2 + $0x1a8] sm:$0xff]
    %v93 = vld [vmem:[#allocation2 + $0x1b0] sm:$0xff]
    %v94 = vld [vmem:[#allocation2 + $0x1b8] sm:$0xff]
    %v95 = vld [vmem:[#allocation2 + $0x1c0] sm:$0xff]
    %v96 = vld [vmem:[#allocation2 + $0x1c8] sm:$0xff]
    %v97 = vld [vmem:[#allocation2 + $0x1d0] sm:$0xff]
    %v98 = vld [vmem:[#allocation2 + $0x1d8] sm:$0xff]
    %v99 = vld [vmem:[#allocation2 + $0x1e0] sm:$0xff]
    %v100 = vld [vmem:[#allocation2 + $0x1e8] sm:$0xff]
    %v101 = vld [vmem:[#allocation2 + $0x1f0] sm:$0xff]
    %v102 = vld [vmem:[#allocation2 + $0x1f8] sm:$0xff]
    %v103 = vld [vmem:[#allocation2 + $0x200] sm:$0xff]
    %v104 = vld [vmem:[#allocation2 + $0x208] sm:$0xff]
    %v105 = vld [vmem:[#allocation2 + $0x210] sm:$0xff]
    %v106 = vld [vmem:[#allocation2 + $0x218] sm:$0xff]
    %v107 = vld [vmem:[#allocation2 + $0x220] sm:$0xff]
    %v108 = vld [vmem:[#allocation2 + $0x228] sm:$0xff]
    %v109 = vld [vmem:[#allocation2 + $0x230] sm:$0xff]
    %v110 = vld [vmem:[#allocation2 + $0x238] sm:$0xff]
    %v111 = vld [vmem:[#allocation2 + $0x240] sm:$0xff]
    %v112 = vld [vmem:[#allocation2 + $0x248] sm:$0xff]
    %v113 = vld [vmem:[#allocation2 + $0x250] sm:$0xff]
    %v114 = vld [vmem:[#allocation2 + $0x258] sm:$0xff]
    %v115 = vld [vmem:[#allocation2 + $0x260] sm:$0xff]
    %v116 = vld [vmem:[#allocation2 + $0x268] sm:$0xff]
    %v117 = vld [vmem:[#allocation2 + $0x270] sm:$0xff]
    %v118 = vld [vmem:[#allocation2 + $0x278] sm:$0xff]
    %v119 = vld [vmem:[#allocation2 + $0x280] sm:$0xff]
    %v120 = vld [vmem:[#allocation2 + $0x288] sm:$0xff]
    %v121 = vld [vmem:[#allocation2 + $0x290] sm:$0xff]
    %v122 = vld [vmem:[#allocation2 + $0x298] sm:$0xff]
    %v123 = vld [vmem:[#allocation2 + $0x2a0] sm:$0xff]
    %v124 = vld [vmem:[#allocation2 + $0x2a8] sm:$0xff]
    %v125 = vld [vmem:[#allocation2 + $0x2b0] sm:$0xff]
    %v126 = vld [vmem:[#allocation2 + $0x2b8] sm:$0xff]
    %v127 = vld [vmem:[#allocation2 + $0x2c0] sm:$0xff]
    %v128 = vld [vmem:[#allocation2 + $0x2c8] sm:$0xff]
    %v129 = vld [vmem:[#allocation2 + $0x2d0] sm:$0xff]
    %v130 = vld [vmem:[#allocation2 + $0x2d8] sm:$0xff]
    %v131 = vld [vmem:[#allocation2 + $0x2e0] sm:$0xff]
    %v132 = vld [vmem:[#allocation2 + $0x2e8] sm:$0xff]
    %v133 = vld [vmem:[#allocation2 + $0x2f0] sm:$0xff]
    %v134 = vld [vmem:[#allocation2 + $0x2f8] sm:$0xff]
    %v135 = vld [vmem:[#allocation2 + $0x300] sm:$0xff]
    %v136 = vld [vmem:[#allocation2 + $0x308] sm:$0xff]
    %v137 = vld [vmem:[#allocation2 + $0x310] sm:$0xff]
    %v138 = vld [vmem:[#allocation2 + $0x318] sm:$0xff]
    %v139 = vld [vmem:[#allocation2 + $0x320] sm:$0xff]
    %v140 = vld [vmem:[#allocation2 + $0x328] sm:$0xff]
    %v141 = vld [vmem:[#allocation2 + $0x330] sm:$0xff]
    %v142 = vld [vmem:[#allocation2 + $0x338] sm:$0xff]
    %v143 = vld [vmem:[#allocation2 + $0x340] sm:$0xff]
    %v144 = vld [vmem:[#allocation2 + $0x348] sm:$0xff]
    %v145 = vld [vmem:[#allocation2 + $0x350] sm:$0xff]
    %v146 = vld [vmem:[#allocation2 + $0x358] sm:$0xff]
    %v147 = vld [vmem:[#allocation2 + $0x360] sm:$0xff]
    %v148 = vld [vmem:[#allocation2 + $0x368] sm:$0xff]
    %v149 = vld [vmem:[#allocation2 + $0x370] sm:$0xff]
    %v150 = vld [vmem:[#allocation2 + $0x378] sm:$0xff]
    %v151 = vld [vmem:[#allocation2 + $0x380] sm:$0xff]
    %v152 = vld [vmem:[#allocation2 + $0x388] sm:$0xff]
    %v153 = vld [vmem:[#allocation2 + $0x390] sm:$0xff]
    %v154 = vld [vmem:[#allocation2 + $0x398] sm:$0xff]
    %v155 = vld [vmem:[#allocation2 + $0x3a0] sm:$0xff]
    %v156 = vld [vmem:[#allocation2 + $0x3a8] sm:$0xff]
    %v157 = vld [vmem:[#allocation2 + $0x3b0] sm:$0xff]
    %v158 = vld [vmem:[#allocation2 + $0x3b8] sm:$0xff]
    %v159 = vld [vmem:[#allocation2 + $0x3c0] sm:$0xff]
    %v160 = vld [vmem:[#allocation2 + $0x3c8] sm:$0xff]
    %v161 = vld [vmem:[#allocation2 + $0x3d0] sm:$0xff]
    %v162 = vld [vmem:[#allocation2 + $0x3d8] sm:$0xff]
    %v163 = vld [vmem:[#allocation2 + $0x3e0] sm:$0xff]
    %v164 = vld [vmem:[#allocation2 + $0x3e8] sm:$0xff]
    %v165 = vld [vmem:[#allocation2 + $0x3f0] sm:$0xff]
    %v166 = vld [vmem:[#allocation2 + $0x3f8] sm:$0xff]
    %v167 = vld [vmem:[%s2] sm:$0x1]
    %v169 = vlaneseq
    %v170 = vshrl.u32 %v169, 7
    %v171 = vsub.s32 0, %v170
    %v172 = vrot.slane %v167, %v171
    %v182 = vunpack.c.l.b16 %v31
    %v183 = vunpack.c.h.b16 %v31
    %v184 = vunpack.c.l.b16 %v32
    %v185 = vunpack.c.h.b16 %v32
    %v186 = vunpack.c.l.b16 %v33
    %v187 = vunpack.c.h.b16 %v33
    %v188 = vunpack.c.l.b16 %v34
    %v189 = vunpack.c.h.b16 %v34
    %v190 = vunpack.c.l.b16 %v35
    %v191 = vunpack.c.h.b16 %v35
    %v192 = vunpack.c.l.b16 %v36
    %v193 = vunpack.c.h.b16 %v36
    %v194 = vunpack.c.l.b16 %v37
    %v195 = vunpack.c.h.b16 %v37
    %v196 = vunpack.c.l.b16 %v38
    %v197 = vunpack.c.h.b16 %v38
    %v198 = vpack.c.b16 %v182, %v182
    %v199 = vpack.c.b16 %v183, %v183
    %v200 = vpack.c.b16 %v184, %v184
    %v201 = vpack.c.b16 %v185, %v185
    %v202 = vpack.c.b16 %v186, %v186
    %v203 = vpack.c.b16 %v187, %v187
    %v204 = vpack.c.b16 %v188, %v188
    %v205 = vpack.c.b16 %v189, %v189
    %v206 = vpack.c.b16 %v190, %v190
    %v207 = vpack.c.b16 %v191, %v191
    %v208 = vpack.c.b16 %v192, %v192
    %v209 = vpack.c.b16 %v193, %v193
    %v210 = vpack.c.b16 %v194, %v194
    %v211 = vpack.c.b16 %v195, %v195
    %v212 = vpack.c.b16 %v196, %v196
    %v213 = vpack.c.b16 %v197, %v197
    %v358 = vunpack.c.l.b16 %v39
    %v359 = vunpack.c.h.b16 %v39
    %v360 = vunpack.c.l.b16 %v40
    %v361 = vunpack.c.h.b16 %v40
    %v362 = vunpack.c.l.b16 %v41
    %v363 = vunpack.c.h.b16 %v41
    %v364 = vunpack.c.l.b16 %v42
    %v365 = vunpack.c.h.b16 %v42
    %v366 = vunpack.c.l.b16 %v43
    %v367 = vunpack.c.h.b16 %v43
    %v368 = vunpack.c.l.b16 %v44
    %v369 = vunpack.c.h.b16 %v44
    %v370 = vunpack.c.l.b16 %v45
    %v371 = vunpack.c.h.b16 %v45
    %v372 = vunpack.c.l.b16 %v46
    %v373 = vunpack.c.h.b16 %v46
    %v374 = vunpack.c.l.b16 %v47
    %v375 = vunpack.c.h.b16 %v47
    %v376 = vunpack.c.l.b16 %v48
    %v377 = vunpack.c.h.b16 %v48
    %v378 = vunpack.c.l.b16 %v49
    %v379 = vunpack.c.h.b16 %v49
    %v380 = vunpack.c.l.b16 %v50
    %v381 = vunpack.c.h.b16 %v50
    %v382 = vunpack.c.l.b16 %v51
    %v383 = vunpack.c.h.b16 %v51
    %v384 = vunpack.c.l.b16 %v52
    %v385 = vunpack.c.h.b16 %v52
    %v386 = vunpack.c.l.b16 %v53
    %v387 = vunpack.c.h.b16 %v53
    %v388 = vunpack.c.l.b16 %v54
    %v389 = vunpack.c.h.b16 %v54
    %v390 = vunpack.c.l.b16 %v55
    %v391 = vunpack.c.h.b16 %v55
    %v392 = vunpack.c.l.b16 %v56
    %v393 = vunpack.c.h.b16 %v56
    %v394 = vunpack.c.l.b16 %v57
    %v395 = vunpack.c.h.b16 %v57
    %v396 = vunpack.c.l.b16 %v58
    %v397 = vunpack.c.h.b16 %v58
    %v398 = vunpack.c.l.b16 %v59
    %v399 = vunpack.c.h.b16 %v59
    %v400 = vunpack.c.l.b16 %v60
    %v401 = vunpack.c.h.b16 %v60
    %v402 = vunpack.c.l.b16 %v61
    %v403 = vunpack.c.h.b16 %v61
    %v404 = vunpack.c.l.b16 %v62
    %v405 = vunpack.c.h.b16 %v62
    %v406 = vunpack.c.l.b16 %v63
    %v407 = vunpack.c.h.b16 %v63
    %v408 = vunpack.c.l.b16 %v64
    %v409 = vunpack.c.h.b16 %v64
    %v410 = vunpack.c.l.b16 %v65
    %v411 = vunpack.c.h.b16 %v65
    %v412 = vunpack.c.l.b16 %v66
    %v413 = vunpack.c.h.b16 %v66
    %v414 = vunpack.c.l.b16 %v67
    %v415 = vunpack.c.h.b16 %v67
    %v416 = vunpack.c.l.b16 %v68
    %v417 = vunpack.c.h.b16 %v68
    %v418 = vunpack.c.l.b16 %v69
    %v419 = vunpack.c.h.b16 %v69
    %v420 = vunpack.c.l.b16 %v70
    %v421 = vunpack.c.h.b16 %v70
    %v422 = vunpack.c.l.b16 %v71
    %v423 = vunpack.c.h.b16 %v71
    %v424 = vunpack.c.l.b16 %v72
    %v425 = vunpack.c.h.b16 %v72
    %v426 = vunpack.c.l.b16 %v73
    %v427 = vunpack.c.h.b16 %v73
    %v428 = vunpack.c.l.b16 %v74
    %v429 = vunpack.c.h.b16 %v74
    %v430 = vunpack.c.l.b16 %v75
    %v431 = vunpack.c.h.b16 %v75
    %v432 = vunpack.c.l.b16 %v76
    %v433 = vunpack.c.h.b16 %v76
    %v434 = vunpack.c.l.b16 %v77
    %v435 = vunpack.c.h.b16 %v77
    %v436 = vunpack.c.l.b16 %v78
    %v437 = vunpack.c.h.b16 %v78
    %v438 = vunpack.c.l.b16 %v79
    %v439 = vunpack.c.h.b16 %v79
    %v440 = vunpack.c.l.b16 %v80
    %v441 = vunpack.c.h.b16 %v80
    %v442 = vunpack.c.l.b16 %v81
    %v443 = vunpack.c.h.b16 %v81
    %v444 = vunpack.c.l.b16 %v82
    %v445 = vunpack.c.h.b16 %v82
    %v446 = vunpack.c.l.b16 %v83
    %v447 = vunpack.c.h.b16 %v83
    %v448 = vunpack.c.l.b16 %v84
    %v449 = vunpack.c.h.b16 %v84
    %v450 = vunpack.c.l.b16 %v85
    %v451 = vunpack.c.h.b16 %v85
    %v452 = vunpack.c.l.b16 %v86
    %v453 = vunpack.c.h.b16 %v86
    %v454 = vunpack.c.l.b16 %v87
    %v455 = vunpack.c.h.b16 %v87
    %v456 = vunpack.c.l.b16 %v88
    %v457 = vunpack.c.h.b16 %v88
    %v458 = vunpack.c.l.b16 %v89
    %v459 = vunpack.c.h.b16 %v89
    %v460 = vunpack.c.l.b16 %v90
    %v461 = vunpack.c.h.b16 %v90
    %v462 = vunpack.c.l.b16 %v91
    %v463 = vunpack.c.h.b16 %v91
    %v464 = vunpack.c.l.b16 %v92
    %v465 = vunpack.c.h.b16 %v92
    %v466 = vunpack.c.l.b16 %v93
    %v467 = vunpack.c.h.b16 %v93
    %v468 = vunpack.c.l.b16 %v94
    %v469 = vunpack.c.h.b16 %v94
    %v470 = vunpack.c.l.b16 %v95
    %v471 = vunpack.c.h.b16 %v95
    %v472 = vunpack.c.l.b16 %v96
    %v473 = vunpack.c.h.b16 %v96
    %v474 = vunpack.c.l.b16 %v97
    %v475 = vunpack.c.h.b16 %v97
    %v476 = vunpack.c.l.b16 %v98
    %v477 = vunpack.c.h.b16 %v98
    %v478 = vunpack.c.l.b16 %v99
    %v479 = vunpack.c.h.b16 %v99
    %v480 = vunpack.c.l.b16 %v100
    %v481 = vunpack.c.h.b16 %v100
    %v482 = vunpack.c.l.b16 %v101
    %v483 = vunpack.c.h.b16 %v101
    %v484 = vunpack.c.l.b16 %v102
    %v485 = vunpack.c.h.b16 %v102
    %v486 = vunpack.c.l.b16 %v103
    %v487 = vunpack.c.h.b16 %v103
    %v488 = vunpack.c.l.b16 %v104
    %v489 = vunpack.c.h.b16 %v104
    %v490 = vunpack.c.l.b16 %v105
    %v491 = vunpack.c.h.b16 %v105
    %v492 = vunpack.c.l.b16 %v106
    %v493 = vunpack.c.h.b16 %v106
    %v494 = vunpack.c.l.b16 %v107
    %v495 = vunpack.c.h.b16 %v107
    %v496 = vunpack.c.l.b16 %v108
    %v497 = vunpack.c.h.b16 %v108
    %v498 = vunpack.c.l.b16 %v109
    %v499 = vunpack.c.h.b16 %v109
    %v500 = vunpack.c.l.b16 %v110
    %v501 = vunpack.c.h.b16 %v110
    %v502 = vunpack.c.l.b16 %v111
    %v503 = vunpack.c.h.b16 %v111
    %v504 = vunpack.c.l.b16 %v112
    %v505 = vunpack.c.h.b16 %v112
    %v506 = vunpack.c.l.b16 %v113
    %v507 = vunpack.c.h.b16 %v113
    %v508 = vunpack.c.l.b16 %v114
    %v509 = vunpack.c.h.b16 %v114
    %v510 = vunpack.c.l.b16 %v115
    %v511 = vunpack.c.h.b16 %v115
    %v512 = vunpack.c.l.b16 %v116
    %v513 = vunpack.c.h.b16 %v116
    %v514 = vunpack.c.l.b16 %v117
    %v515 = vunpack.c.h.b16 %v117
    %v516 = vunpack.c.l.b16 %v118
    %v517 = vunpack.c.h.b16 %v118
    %v518 = vunpack.c.l.b16 %v119
    %v519 = vunpack.c.h.b16 %v119
    %v520 = vunpack.c.l.b16 %v120
    %v521 = vunpack.c.h.b16 %v120
    %v522 = vunpack.c.l.b16 %v121
    %v523 = vunpack.c.h.b16 %v121
    %v524 = vunpack.c.l.b16 %v122
    %v525 = vunpack.c.h.b16 %v122
    %v526 = vunpack.c.l.b16 %v123
    %v527 = vunpack.c.h.b16 %v123
    %v528 = vunpack.c.l.b16 %v124
    %v529 = vunpack.c.h.b16 %v124
    %v530 = vunpack.c.l.b16 %v125
    %v531 = vunpack.c.h.b16 %v125
    %v532 = vunpack.c.l.b16 %v126
    %v533 = vunpack.c.h.b16 %v126
    %v534 = vunpack.c.l.b16 %v127
    %v535 = vunpack.c.h.b16 %v127
    %v536 = vunpack.c.l.b16 %v128
    %v537 = vunpack.c.h.b16 %v128
    %v538 = vunpack.c.l.b16 %v129
    %v539 = vunpack.c.h.b16 %v129
    %v540 = vunpack.c.l.b16 %v130
    %v541 = vunpack.c.h.b16 %v130
    %v542 = vunpack.c.l.b16 %v131
    %v543 = vunpack.c.h.b16 %v131
    %v544 = vunpack.c.l.b16 %v132
    %v545 = vunpack.c.h.b16 %v132
    %v546 = vunpack.c.l.b16 %v133
    %v547 = vunpack.c.h.b16 %v133
    %v548 = vunpack.c.l.b16 %v134
    %v549 = vunpack.c.h.b16 %v134
    %v550 = vunpack.c.l.b16 %v135
    %v551 = vunpack.c.h.b16 %v135
    %v552 = vunpack.c.l.b16 %v136
    %v553 = vunpack.c.h.b16 %v136
    %v554 = vunpack.c.l.b16 %v137
    %v555 = vunpack.c.h.b16 %v137
    %v556 = vunpack.c.l.b16 %v138
    %v557 = vunpack.c.h.b16 %v138
    %v558 = vunpack.c.l.b16 %v139
    %v559 = vunpack.c.h.b16 %v139
    %v560 = vunpack.c.l.b16 %v140
    %v561 = vunpack.c.h.b16 %v140
    %v562 = vunpack.c.l.b16 %v141
    %v563 = vunpack.c.h.b16 %v141
    %v564 = vunpack.c.l.b16 %v142
    %v565 = vunpack.c.h.b16 %v142
    %v566 = vunpack.c.l.b16 %v143
    %v567 = vunpack.c.h.b16 %v143
    %v568 = vunpack.c.l.b16 %v144
    %v569 = vunpack.c.h.b16 %v144
    %v570 = vunpack.c.l.b16 %v145
    %v571 = vunpack.c.h.b16 %v145
    %v572 = vunpack.c.l.b16 %v146
    %v573 = vunpack.c.h.b16 %v146
    %v574 = vunpack.c.l.b16 %v147
    %v575 = vunpack.c.h.b16 %v147
    %v576 = vunpack.c.l.b16 %v148
    %v577 = vunpack.c.h.b16 %v148
    %v578 = vunpack.c.l.b16 %v149
    %v579 = vunpack.c.h.b16 %v149
    %v580 = vunpack.c.l.b16 %v150
    %v581 = vunpack.c.h.b16 %v150
    %v582 = vunpack.c.l.b16 %v151
    %v583 = vunpack.c.h.b16 %v151
    %v584 = vunpack.c.l.b16 %v152
    %v585 = vunpack.c.h.b16 %v152
    %v586 = vunpack.c.l.b16 %v153
    %v587 = vunpack.c.h.b16 %v153
    %v588 = vunpack.c.l.b16 %v154
    %v589 = vunpack.c.h.b16 %v154
    %v590 = vunpack.c.l.b16 %v155
    %v591 = vunpack.c.h.b16 %v155
    %v592 = vunpack.c.l.b16 %v156
    %v593 = vunpack.c.h.b16 %v156
    %v594 = vunpack.c.l.b16 %v157
    %v595 = vunpack.c.h.b16 %v157
    %v596 = vunpack.c.l.b16 %v158
    %v597 = vunpack.c.h.b16 %v158
    %v598 = vunpack.c.l.b16 %v159
    %v599 = vunpack.c.h.b16 %v159
    %v600 = vunpack.c.l.b16 %v160
    %v601 = vunpack.c.h.b16 %v160
    %v602 = vunpack.c.l.b16 %v161
    %v603 = vunpack.c.h.b16 %v161
    %v604 = vunpack.c.l.b16 %v162
    %v605 = vunpack.c.h.b16 %v162
    %v606 = vunpack.c.l.b16 %v163
    %v607 = vunpack.c.h.b16 %v163
    %v608 = vunpack.c.l.b16 %v164
    %v609 = vunpack.c.h.b16 %v164
    %v610 = vunpack.c.l.b16 %v165
    %v611 = vunpack.c.h.b16 %v165
    %v612 = vunpack.c.l.b16 %v166
    %v613 = vunpack.c.h.b16 %v166
    %v614 = vpack.c.b16 %v374, %v358
    %v615 = vpack.c.b16 %v375, %v359
    %v616 = vpack.c.b16 %v376, %v360
    %v617 = vpack.c.b16 %v377, %v361
    %v618 = vpack.c.b16 %v378, %v362
    %v619 = vpack.c.b16 %v379, %v363
    %v620 = vpack.c.b16 %v380, %v364
    %v621 = vpack.c.b16 %v381, %v365
    %v622 = vpack.c.b16 %v382, %v366
    %v623 = vpack.c.b16 %v383, %v367
    %v624 = vpack.c.b16 %v384, %v368
    %v625 = vpack.c.b16 %v385, %v369
    %v626 = vpack.c.b16 %v386, %v370
    %v627 = vpack.c.b16 %v387, %v371
    %v628 = vpack.c.b16 %v388, %v372
    %v629 = vpack.c.b16 %v389, %v373
    %v630 = vpack.c.b16 %v406, %v390
    %v631 = vpack.c.b16 %v407, %v391
    %v632 = vpack.c.b16 %v408, %v392
    %v633 = vpack.c.b16 %v409, %v393
    %v634 = vpack.c.b16 %v410, %v394
    %v635 = vpack.c.b16 %v411, %v395
    %v636 = vpack.c.b16 %v412, %v396
    %v637 = vpack.c.b16 %v413, %v397
    %v638 = vpack.c.b16 %v414, %v398
    %v639 = vpack.c.b16 %v415, %v399
    %v640 = vpack.c.b16 %v416, %v400
    %v641 = vpack.c.b16 %v417, %v401
    %v642 = vpack.c.b16 %v418, %v402
    %v643 = vpack.c.b16 %v419, %v403
    %v644 = vpack.c.b16 %v420, %v404
    %v645 = vpack.c.b16 %v421, %v405
    %v646 = vpack.c.b16 %v438, %v422
    %v647 = vpack.c.b16 %v439, %v423
    %v648 = vpack.c.b16 %v440, %v424
    %v649 = vpack.c.b16 %v441, %v425
    %v650 = vpack.c.b16 %v442, %v426
    %v651 = vpack.c.b16 %v443, %v427
    %v652 = vpack.c.b16 %v444, %v428
    %v653 = vpack.c.b16 %v445, %v429
    %v654 = vpack.c.b16 %v446, %v430
    %v655 = vpack.c.b16 %v447, %v431
    %v656 = vpack.c.b16 %v448, %v432
    %v657 = vpack.c.b16 %v449, %v433
    %v658 = vpack.c.b16 %v450, %v434
    %v659 = vpack.c.b16 %v451, %v435
    %v660 = vpack.c.b16 %v452, %v436
    %v661 = vpack.c.b16 %v453, %v437
    %v662 = vpack.c.b16 %v470, %v454
    %v663 = vpack.c.b16 %v471, %v455
    %v664 = vpack.c.b16 %v472, %v456
    %v665 = vpack.c.b16 %v473, %v457
    %v666 = vpack.c.b16 %v474, %v458
    %v667 = vpack.c.b16 %v475, %v459
    %v668 = vpack.c.b16 %v476, %v460
    %v669 = vpack.c.b16 %v477, %v461
    %v670 = vpack.c.b16 %v478, %v462
    %v671 = vpack.c.b16 %v479, %v463
    %v672 = vpack.c.b16 %v480, %v464
    %v673 = vpack.c.b16 %v481, %v465
    %v674 = vpack.c.b16 %v482, %v466
    %v675 = vpack.c.b16 %v483, %v467
    %v676 = vpack.c.b16 %v484, %v468
    %v677 = vpack.c.b16 %v485, %v469
    %v678 = vpack.c.b16 %v502, %v486
    %v679 = vpack.c.b16 %v503, %v487
    %v680 = vpack.c.b16 %v504, %v488
    %v681 = vpack.c.b16 %v505, %v489
    %v682 = vpack.c.b16 %v506, %v490
    %v683 = vpack.c.b16 %v507, %v491
    %v684 = vpack.c.b16 %v508, %v492
    %v685 = vpack.c.b16 %v509, %v493
    %v686 = vpack.c.b16 %v510, %v494
    %v687 = vpack.c.b16 %v511, %v495
    %v688 = vpack.c.b16 %v512, %v496
    %v689 = vpack.c.b16 %v513, %v497
    %v690 = vpack.c.b16 %v514, %v498
    %v691 = vpack.c.b16 %v515, %v499
    %v692 = vpack.c.b16 %v516, %v500
    %v693 = vpack.c.b16 %v517, %v501
    %v694 = vpack.c.b16 %v534, %v518
    %v695 = vpack.c.b16 %v535, %v519
    %v696 = vpack.c.b16 %v536, %v520
    %v697 = vpack.c.b16 %v537, %v521
    %v698 = vpack.c.b16 %v538, %v522
    %v699 = vpack.c.b16 %v539, %v523
    %v700 = vpack.c.b16 %v540, %v524
    %v701 = vpack.c.b16 %v541, %v525
    %v702 = vpack.c.b16 %v542, %v526
    %v703 = vpack.c.b16 %v543, %v527
    %v704 = vpack.c.b16 %v544, %v528
    %v705 = vpack.c.b16 %v545, %v529
    %v706 = vpack.c.b16 %v546, %v530
    %v707 = vpack.c.b16 %v547, %v531
    %v708 = vpack.c.b16 %v548, %v532
    %v709 = vpack.c.b16 %v549, %v533
    %v710 = vpack.c.b16 %v566, %v550
    %v711 = vpack.c.b16 %v567, %v551
    %v712 = vpack.c.b16 %v568, %v552
    %v713 = vpack.c.b16 %v569, %v553
    %v714 = vpack.c.b16 %v570, %v554
    %v715 = vpack.c.b16 %v571, %v555
    %v716 = vpack.c.b16 %v572, %v556
    %v717 = vpack.c.b16 %v573, %v557
    %v718 = vpack.c.b16 %v574, %v558
    %v719 = vpack.c.b16 %v575, %v559
    %v720 = vpack.c.b16 %v576, %v560
    %v721 = vpack.c.b16 %v577, %v561
    %v722 = vpack.c.b16 %v578, %v562
    %v723 = vpack.c.b16 %v579, %v563
    %v724 = vpack.c.b16 %v580, %v564
    %v725 = vpack.c.b16 %v581, %v565
    %v726 = vpack.c.b16 %v598, %v582
    %v727 = vpack.c.b16 %v599, %v583
    %v728 = vpack.c.b16 %v600, %v584
    %v729 = vpack.c.b16 %v601, %v585
    %v730 = vpack.c.b16 %v602, %v586
    %v731 = vpack.c.b16 %v603, %v587
    %v732 = vpack.c.b16 %v604, %v588
    %v733 = vpack.c.b16 %v605, %v589
    %v734 = vpack.c.b16 %v606, %v590
    %v735 = vpack.c.b16 %v607, %v591
    %v736 = vpack.c.b16 %v608, %v592
    %v737 = vpack.c.b16 %v609, %v593
    %v738 = vpack.c.b16 %v610, %v594
    %v739 = vpack.c.b16 %v611, %v595
    %v740 = vpack.c.b16 %v612, %v596
    %v741 = vpack.c.b16 %v613, %v597
    %870 = vmatprep.subr.bf16.mxu0 %v615
    %871 = vmatpush1.bf16.xpose.msra.mxu0 %v614
    %872 = vmatprep.subr.bf16.mxu0 %v631
    %873 = vmatpush1.bf16.xpose.msra.mxu0 %v630
    %874 = vmatprep.subr.bf16.mxu0 %v647
    %875 = vmatpush1.bf16.xpose.msra.mxu0 %v646
    %876 = vmatprep.subr.bf16.mxu0 %v663
    %877 = vmatpush1.bf16.xpose.msra.mxu0 %v662
    %878 = vmatprep.subr.bf16.mxu0 %v679
    %879 = vmatpush1.bf16.xpose.msra.mxu0 %v678
    %880 = vmatprep.subr.bf16.mxu0 %v695
    %881 = vmatpush1.bf16.xpose.msra.mxu0 %v694
    %882 = vmatprep.subr.bf16.mxu0 %v711
    %883 = vmatpush1.bf16.xpose.msra.mxu0 %v710
    %884 = vmatprep.subr.bf16.mxu0 %v727
    %885 = vmatpush1.bf16.xpose.msra.mxu0 %v726
    %886 = vmatprep.subr.bf16.mxu0 0
    %887 = vmatpush1.bf16.xpose.msra.mxu0 0
    %888 = vmatprep.subr.bf16.mxu0 0
    %889 = vmatpush1.bf16.xpose.msra.mxu0 0
    %890 = vmatprep.subr.bf16.mxu0 0
    %891 = vmatpush1.bf16.xpose.msra.mxu0 0
    %892 = vmatprep.subr.bf16.mxu0 0
    %893 = vmatpush1.bf16.xpose.msra.mxu0 0
    %894 = vmatprep.subr.bf16.mxu0 0
    %895 = vmatpush1.bf16.xpose.msra.mxu0 0
    %896 = vmatprep.subr.bf16.mxu0 0
    %897 = vmatpush1.bf16.xpose.msra.mxu0 0
    %898 = vmatprep.subr.bf16.mxu0 0
    %899 = vmatpush1.bf16.xpose.msra.mxu0 0
    %900 = vmatprep.subr.bf16.mxu0 0
    %901 = vmatpush1.bf16.xpose.msra.mxu0 0
    %902 = vmatprep.mubr.bf16.mxu0 %v199
    %903 = vmatmul.mubr.bf16.gmra.mrb[0].mxu0 %v198
    %v904 = vpop.f32.mrb[0].mxu0
    %v905 = vadd.f32 %v172, %v904
    %v906 = vpop.f32.mrb[0].mxu0
    %v907 = vpop.f32.mrb[0].mxu0
    %v908 = vpop.f32.mrb[0].mxu0
    %909 = vdwg.mxu0
    %910 = vmatprep.subr.bf16.mxu0 %v617
    %911 = vmatpush1.bf16.xpose.msra.mxu0 %v616
    %912 = vmatprep.subr.bf16.mxu0 %v633
    %913 = vmatpush1.bf16.xpose.msra.mxu0 %v632
    %914 = vmatprep.subr.bf16.mxu0 %v649
    %915 = vmatpush1.bf16.xpose.msra.mxu0 %v648
    %916 = vmatprep.subr.bf16.mxu0 %v665
    %917 = vmatpush1.bf16.xpose.msra.mxu0 %v664
    %918 = vmatprep.subr.bf16.mxu0 %v681
    %919 = vmatpush1.bf16.xpose.msra.mxu0 %v680
    %920 = vmatprep.subr.bf16.mxu0 %v697
    %921 = vmatpush1.bf16.xpose.msra.mxu0 %v696
    %922 = vmatprep.subr.bf16.mxu0 %v713
    %923 = vmatpush1.bf16.xpose.msra.mxu0 %v712
    %924 = vmatprep.subr.bf16.mxu0 %v729
    %925 = vmatpush1.bf16.xpose.msra.mxu0 %v728
    %926 = vmatprep.subr.bf16.mxu0 0
    %927 = vmatpush1.bf16.xpose.msra.mxu0 0
    %928 = vmatprep.subr.bf16.mxu0 0
    %929 = vmatpush1.bf16.xpose.msra.mxu0 0
    %930 = vmatprep.subr.bf16.mxu0 0
    %931 = vmatpush1.bf16.xpose.msra.mxu0 0
    %932 = vmatprep.subr.bf16.mxu0 0
    %933 = vmatpush1.bf16.xpose.msra.mxu0 0
    %934 = vmatprep.subr.bf16.mxu0 0
    %935 = vmatpush1.bf16.xpose.msra.mxu0 0
    %936 = vmatprep.subr.bf16.mxu0 0
    %937 = vmatpush1.bf16.xpose.msra.mxu0 0
    %938 = vmatprep.subr.bf16.mxu0 0
    %939 = vmatpush1.bf16.xpose.msra.mxu0 0
    %940 = vmatprep.subr.bf16.mxu0 0
    %941 = vmatpush1.bf16.xpose.msra.mxu0 0
    %942 = vmatprep.mubr.bf16.mxu0 %v201
    %943 = vmatmul.mubr.bf16.gmra.mrb[0].mxu0 %v200
    %v944 = vpop.f32.mrb[0].mxu0
    %v945 = vadd.f32 %v905, %v944
    %v946 = vpop.f32.mrb[0].mxu0
    %v947 = vpop.f32.mrb[0].mxu0
    %v948 = vpop.f32.mrb[0].mxu0
    %949 = vdwg.mxu0
    %950 = vmatprep.subr.bf16.mxu0 %v619
    %951 = vmatpush1.bf16.xpose.msra.mxu0 %v618
    %952 = vmatprep.subr.bf16.mxu0 %v635
    %953 = vmatpush1.bf16.xpose.msra.mxu0 %v634
    %954 = vmatprep.subr.bf16.mxu0 %v651
    %955 = vmatpush1.bf16.xpose.msra.mxu0 %v650
    %956 = vmatprep.subr.bf16.mxu0 %v667
    %957 = vmatpush1.bf16.xpose.msra.mxu0 %v666
    %958 = vmatprep.subr.bf16.mxu0 %v683
    %959 = vmatpush1.bf16.xpose.msra.mxu0 %v682
    %960 = vmatprep.subr.bf16.mxu0 %v699
    %961 = vmatpush1.bf16.xpose.msra.mxu0 %v698
    %962 = vmatprep.subr.bf16.mxu0 %v715
    %963 = vmatpush1.bf16.xpose.msra.mxu0 %v714
    %964 = vmatprep.subr.bf16.mxu0 %v731
    %965 = vmatpush1.bf16.xpose.msra.mxu0 %v730
    %966 = vmatprep.subr.bf16.mxu0 0
    %967 = vmatpush1.bf16.xpose.msra.mxu0 0
    %968 = vmatprep.subr.bf16.mxu0 0
    %969 = vmatpush1.bf16.xpose.msra.mxu0 0
    %970 = vmatprep.subr.bf16.mxu0 0
    %971 = vmatpush1.bf16.xpose.msra.mxu0 0
    %972 = vmatprep.subr.bf16.mxu0 0
    %973 = vmatpush1.bf16.xpose.msra.mxu0 0
    %974 = vmatprep.subr.bf16.mxu0 0
    %975 = vmatpush1.bf16.xpose.msra.mxu0 0
    %976 = vmatprep.subr.bf16.mxu0 0
    %977 = vmatpush1.bf16.xpose.msra.mxu0 0
    %978 = vmatprep.subr.bf16.mxu0 0
    %979 = vmatpush1.bf16.xpose.msra.mxu0 0
    %980 = vmatprep.subr.bf16.mxu0 0
    %981 = vmatpush1.bf16.xpose.msra.mxu0 0
    %982 = vmatprep.mubr.bf16.mxu0 %v203
    %983 = vmatmul.mubr.bf16.gmra.mrb[0].mxu0 %v202
    %v984 = vpop.f32.mrb[0].mxu0
    %v985 = vadd.f32 %v945, %v984
    %v986 = vpop.f32.mrb[0].mxu0
    %v987 = vpop.f32.mrb[0].mxu0
    %v988 = vpop.f32.mrb[0].mxu0
    %989 = vdwg.mxu0
    %990 = vmatprep.subr.bf16.mxu0 %v621
    %991 = vmatpush1.bf16.xpose.msra.mxu0 %v620
    %992 = vmatprep.subr.bf16.mxu0 %v637
    %993 = vmatpush1.bf16.xpose.msra.mxu0 %v636
    %994 = vmatprep.subr.bf16.mxu0 %v653
    %995 = vmatpush1.bf16.xpose.msra.mxu0 %v652
    %996 = vmatprep.subr.bf16.mxu0 %v669
    %997 = vmatpush1.bf16.xpose.msra.mxu0 %v668
    %998 = vmatprep.subr.bf16.mxu0 %v685
    %999 = vmatpush1.bf16.xpose.msra.mxu0 %v684
    %1000 = vmatprep.subr.bf16.mxu0 %v701
    %1001 = vmatpush1.bf16.xpose.msra.mxu0 %v700
    %1002 = vmatprep.subr.bf16.mxu0 %v717
    %1003 = vmatpush1.bf16.xpose.msra.mxu0 %v716
    %1004 = vmatprep.subr.bf16.mxu0 %v733
    %1005 = vmatpush1.bf16.xpose.msra.mxu0 %v732
    %1006 = vmatprep.subr.bf16.mxu0 0
    %1007 = vmatpush1.bf16.xpose.msra.mxu0 0
    %1008 = vmatprep.subr.bf16.mxu0 0
    %1009 = vmatpush1.bf16.xpose.msra.mxu0 0
    %1010 = vmatprep.subr.bf16.mxu0 0
    %1011 = vmatpush1.bf16.xpose.msra.mxu0 0
    %1012 = vmatprep.subr.bf16.mxu0 0
    %1013 = vmatpush1.bf16.xpose.msra.mxu0 0
    %1014 = vmatprep.subr.bf16.mxu0 0
    %1015 = vmatpush1.bf16.xpose.msra.mxu0 0
    %1016 = vmatprep.subr.bf16.mxu0 0
    %1017 = vmatpush1.bf16.xpose.msra.mxu0 0
    %1018 = vmatprep.subr.bf16.mxu0 0
    %1019 = vmatpush1.bf16.xpose.msra.mxu0 0
    %1020 = vmatprep.subr.bf16.mxu0 0
    %1021 = vmatpush1.bf16.xpose.msra.mxu0 0
    %1022 = vmatprep.mubr.bf16.mxu0 %v205
    %1023 = vmatmul.mubr.bf16.gmra.mrb[0].mxu0 %v204
    %v1024 = vpop.f32.mrb[0].mxu0
    %v1025 = vadd.f32 %v985, %v1024
    %v1026 = vpop.f32.mrb[0].mxu0
    %v1027 = vpop.f32.mrb[0].mxu0
    %v1028 = vpop.f32.mrb[0].mxu0
    %1029 = vdwg.mxu0
    %1030 = vmatprep.subr.bf16.mxu0 %v623
    %1031 = vmatpush1.bf16.xpose.msra.mxu0 %v622
    %1032 = vmatprep.subr.bf16.mxu0 %v639
    %1033 = vmatpush1.bf16.xpose.msra.mxu0 %v638
    %1034 = vmatprep.subr.bf16.mxu0 %v655
    %1035 = vmatpush1.bf16.xpose.msra.mxu0 %v654
    %1036 = vmatprep.subr.bf16.mxu0 %v671
    %1037 = vmatpush1.bf16.xpose.msra.mxu0 %v670
    %1038 = vmatprep.subr.bf16.mxu0 %v687
    %1039 = vmatpush1.bf16.xpose.msra.mxu0 %v686
    %1040 = vmatprep.subr.bf16.mxu0 %v703
    %1041 = vmatpush1.bf16.xpose.msra.mxu0 %v702
    %1042 = vmatprep.subr.bf16.mxu0 %v719
    %1043 = vmatpush1.bf16.xpose.msra.mxu0 %v718
    %1044 = vmatprep.subr.bf16.mxu0 %v735
    %1045 = vmatpush1.bf16.xpose.msra.mxu0 %v734
    %1046 = vmatprep.subr.bf16.mxu0 0
    %1047 = vmatpush1.bf16.xpose.msra.mxu0 0
    %1048 = vmatprep.subr.bf16.mxu0 0
    %1049 = vmatpush1.bf16.xpose.msra.mxu0 0
    %1050 = vmatprep.subr.bf16.mxu0 0
    %1051 = vmatpush1.bf16.xpose.msra.mxu0 0
    %1052 = vmatprep.subr.bf16.mxu0 0
    %1053 = vmatpush1.bf16.xpose.msra.mxu0 0
    %1054 = vmatprep.subr.bf16.mxu0 0
    %1055 = vmatpush1.bf16.xpose.msra.mxu0 0
    %1056 = vmatprep.subr.bf16.mxu0 0
    %1057 = vmatpush1.bf16.xpose.msra.mxu0 0
    %1058 = vmatprep.subr.bf16.mxu0 0
    %1059 = vmatpush1.bf16.xpose.msra.mxu0 0
    %1060 = vmatprep.subr.bf16.mxu0 0
    %1061 = vmatpush1.bf16.xpose.msra.mxu0 0
    %1062 = vmatprep.mubr.bf16.mxu0 %v207
    %1063 = vmatmul.mubr.bf16.gmra.mrb[0].mxu0 %v206
    %v1064 = vpop.f32.mrb[0].mxu0
    %v1065 = vadd.f32 %v1025, %v1064
    %v1066 = vpop.f32.mrb[0].mxu0
    %v1067 = vpop.f32.mrb[0].mxu0
    %v1068 = vpop.f32.mrb[0].mxu0
    %1069 = vdwg.mxu0
    %1070 = vmatprep.subr.bf16.mxu0 %v625
    %1071 = vmatpush1.bf16.xpose.msra.mxu0 %v624
    %1072 = vmatprep.subr.bf16.mxu0 %v641
    %1073 = vmatpush1.bf16.xpose.msra.mxu0 %v640
    %1074 = vmatprep.subr.bf16.mxu0 %v657
    %1075 = vmatpush1.bf16.xpose.msra.mxu0 %v656
    %1076 = vmatprep.subr.bf16.mxu0 %v673
    %1077 = vmatpush1.bf16.xpose.msra.mxu0 %v672
    %1078 = vmatprep.subr.bf16.mxu0 %v689
    %1079 = vmatpush1.bf16.xpose.msra.mxu0 %v688
    %1080 = vmatprep.subr.bf16.mxu0 %v705
    %1081 = vmatpush1.bf16.xpose.msra.mxu0 %v704
    %1082 = vmatprep.subr.bf16.mxu0 %v721
    %1083 = vmatpush1.bf16.xpose.msra.mxu0 %v720
    %1084 = vmatprep.subr.bf16.mxu0 %v737
    %1085 = vmatpush1.bf16.xpose.msra.mxu0 %v736
    %1086 = vmatprep.subr.bf16.mxu0 0
    %1087 = vmatpush1.bf16.xpose.msra.mxu0 0
    %1088 = vmatprep.subr.bf16.mxu0 0
    %1089 = vmatpush1.bf16.xpose.msra.mxu0 0
    %1090 = vmatprep.subr.bf16.mxu0 0
    %1091 = vmatpush1.bf16.xpose.msra.mxu0 0
    %1092 = vmatprep.subr.bf16.mxu0 0
    %1093 = vmatpush1.bf16.xpose.msra.mxu0 0
    %1094 = vmatprep.subr.bf16.mxu0 0
    %1095 = vmatpush1.bf16.xpose.msra.mxu0 0
    %1096 = vmatprep.subr.bf16.mxu0 0
    %1097 = vmatpush1.bf16.xpose.msra.mxu0 0
    %1098 = vmatprep.subr.bf16.mxu0 0
    %1099 = vmatpush1.bf16.xpose.msra.mxu0 0
    %1100 = vmatprep.subr.bf16.mxu0 0
    %1101 = vmatpush1.bf16.xpose.msra.mxu0 0
    %1102 = vmatprep.mubr.bf16.mxu0 %v209
    %1103 = vmatmul.mubr.bf16.gmra.mrb[0].mxu0 %v208
    %v1104 = vpop.f32.mrb[0].mxu0
    %v1105 = vadd.f32 %v1065, %v1104
    %v1106 = vpop.f32.mrb[0].mxu0
    %v1107 = vpop.f32.mrb[0].mxu0
    %v1108 = vpop.f32.mrb[0].mxu0
    %1109 = vdwg.mxu0
    %1110 = vmatprep.subr.bf16.mxu0 %v627
    %1111 = vmatpush1.bf16.xpose.msra.mxu0 %v626
    %1112 = vmatprep.subr.bf16.mxu0 %v643
    %1113 = vmatpush1.bf16.xpose.msra.mxu0 %v642
    %1114 = vmatprep.subr.bf16.mxu0 %v659
    %1115 = vmatpush1.bf16.xpose.msra.mxu0 %v658
    %1116 = vmatprep.subr.bf16.mxu0 %v675
    %1117 = vmatpush1.bf16.xpose.msra.mxu0 %v674
    %1118 = vmatprep.subr.bf16.mxu0 %v691
    %1119 = vmatpush1.bf16.xpose.msra.mxu0 %v690
    %1120 = vmatprep.subr.bf16.mxu0 %v707
    %1121 = vmatpush1.bf16.xpose.msra.mxu0 %v706
    %1122 = vmatprep.subr.bf16.mxu0 %v723
    %1123 = vmatpush1.bf16.xpose.msra.mxu0 %v722
    %1124 = vmatprep.subr.bf16.mxu0 %v739
    %1125 = vmatpush1.bf16.xpose.msra.mxu0 %v738
    %1126 = vmatprep.subr.bf16.mxu0 0
    %1127 = vmatpush1.bf16.xpose.msra.mxu0 0
    %1128 = vmatprep.subr.bf16.mxu0 0
    %1129 = vmatpush1.bf16.xpose.msra.mxu0 0
    %1130 = vmatprep.subr.bf16.mxu0 0
    %1131 = vmatpush1.bf16.xpose.msra.mxu0 0
    %1132 = vmatprep.subr.bf16.mxu0 0
    %1133 = vmatpush1.bf16.xpose.msra.mxu0 0
    %1134 = vmatprep.subr.bf16.mxu0 0
    %1135 = vmatpush1.bf16.xpose.msra.mxu0 0
    %1136 = vmatprep.subr.bf16.mxu0 0
    %1137 = vmatpush1.bf16.xpose.msra.mxu0 0
    %1138 = vmatprep.subr.bf16.mxu0 0
    %1139 = vmatpush1.bf16.xpose.msra.mxu0 0
    %1140 = vmatprep.subr.bf16.mxu0 0
    %1141 = vmatpush1.bf16.xpose.msra.mxu0 0
    %1142 = vmatprep.mubr.bf16.mxu0 %v211
    %1143 = vmatmul.mubr.bf16.gmra.mrb[0].mxu0 %v210
    %v1144 = vpop.f32.mrb[0].mxu0
    %v1145 = vadd.f32 %v1105, %v1144
    %v1146 = vpop.f32.mrb[0].mxu0
    %v1147 = vpop.f32.mrb[0].mxu0
    %v1148 = vpop.f32.mrb[0].mxu0
    %1149 = vdwg.mxu0
    %1150 = vmatprep.subr.bf16.mxu0 %v629
    %1151 = vmatpush1.bf16.xpose.msra.mxu0 %v628
    %1152 = vmatprep.subr.bf16.mxu0 %v645
    %1153 = vmatpush1.bf16.xpose.msra.mxu0 %v644
    %1154 = vmatprep.subr.bf16.mxu0 %v661
    %1155 = vmatpush1.bf16.xpose.msra.mxu0 %v660
    %1156 = vmatprep.subr.bf16.mxu0 %v677
    %1157 = vmatpush1.bf16.xpose.msra.mxu0 %v676
    %1158 = vmatprep.subr.bf16.mxu0 %v693
    %1159 = vmatpush1.bf16.xpose.msra.mxu0 %v692
    %1160 = vmatprep.subr.bf16.mxu0 %v709
    %1161 = vmatpush1.bf16.xpose.msra.mxu0 %v708
    %1162 = vmatprep.subr.bf16.mxu0 %v725
    %1163 = vmatpush1.bf16.xpose.msra.mxu0 %v724
    %1164 = vmatprep.subr.bf16.mxu0 %v741
    %1165 = vmatpush1.bf16.xpose.msra.mxu0 %v740
    %1166 = vmatprep.subr.bf16.mxu0 0
    %1167 = vmatpush1.bf16.xpose.msra.mxu0 0
    %1168 = vmatprep.subr.bf16.mxu0 0
    %1169 = vmatpush1.bf16.xpose.msra.mxu0 0
    %1170 = vmatprep.subr.bf16.mxu0 0
    %1171 = vmatpush1.bf16.xpose.msra.mxu0 0
    %1172 = vmatprep.subr.bf16.mxu0 0
    %1173 = vmatpush1.bf16.xpose.msra.mxu0 0
    %1174 = vmatprep.subr.bf16.mxu0 0
    %1175 = vmatpush1.bf16.xpose.msra.mxu0 0
    %1176 = vmatprep.subr.bf16.mxu0 0
    %1177 = vmatpush1.bf16.xpose.msra.mxu0 0
    %1178 = vmatprep.subr.bf16.mxu0 0
    %1179 = vmatpush1.bf16.xpose.msra.mxu0 0
    %1180 = vmatprep.subr.bf16.mxu0 0
    %1181 = vmatpush1.bf16.xpose.msra.mxu0 0
    %1182 = vmatprep.mubr.bf16.mxu0 %v213
    %1183 = vmatmul.mubr.bf16.gmra.mrb[0].mxu0 %v212
    %v1184 = vpop.f32.mrb[0].mxu0
    %v1185 = vadd.f32 %v1145, %v1184
    %v1186 = vpop.f32.mrb[0].mxu0
    %v1187 = vpop.f32.mrb[0].mxu0
    %v1188 = vpop.f32.mrb[0].mxu0
    %1189 = vdwg.mxu0
    %v1190 = vadd.f32 %v1185, 0.168
    %vm1191 = vcmp.gt.f32.partialorder %v1190, 0.5
    %vm1192 = vmpackc.low %vm1191, %vm1191
    %vm1193 = vmpackc.even %vm1192, %vm1192
    %v1194 = vsel %vm1193, 16843009, 0
    %1195 = vst [vmem:[%s3] sm:$0x3] %v1194
    // Predicated region
    $region18: #{_ln_forward.1} parent=1 // pred_check
      _
    $region19: #{_ln_forward.1} parent=1 // pred_check_branch
      %1197 = sbr.rel (0) target = $region21
    $region20: #{_ln_forward.1} parent=1 // pred_region
      _
    $region21: #{_ln_forward.1} parent=1 // pred_fallthru
      _
    // Predicated region
    $region22: #{_ln_forward.1} parent=1 // pred_check
      _
    $region23: #{_ln_forward.1} parent=1 // pred_check_branch
      %1199 = sbr.rel (0) target = $region25
    $region24: #{_ln_forward.1} parent=1 // pred_region
      _
    $region25: #{_ln_forward.1} parent=1 // pred_fallthru
      _
    %1200 = vsyncpa [#allocation3], 1

</llo_original>
